<compile_context>
chip_gen: v5e
topology: v5e:2x2
jax: 0.10.0
libtpu: 0.0.40
codegen_flags: <defaults>
</compile_context>

<pallas_src>
import functools

import jax
import jax.numpy as jnp
from jax.experimental import pallas as pl
from jax.experimental.pallas import tpu as pltpu


def _round_up(x, m):
    return ((x + m - 1) // m) * m


def mlp_kernel(x_ref,
               w0_ref, b0_ref,
               w1_ref, b1_ref,
               w2_ref, b2_ref,
               w3_ref, b3_ref,
               o_ref):
    # Fused MLP hot path: 4 MXU matmuls + 3 ReLUs on one batch tile, all in VMEM.
    # x arrives as f32 and is cast to bf16 on the VPU (free filler under the MXU
    # work); matmuls accumulate in f32; bias add + ReLU stay in f32 (v5e-safe),
    # activations re-cast to bf16 between layers.
    h = x_ref[...].astype(jnp.bfloat16)

    h = jnp.dot(h, w0_ref[...], preferred_element_type=jnp.float32) + b0_ref[...]
    h = jnp.maximum(h, 0.0).astype(jnp.bfloat16)

    h = jnp.dot(h, w1_ref[...], preferred_element_type=jnp.float32) + b1_ref[...]
    h = jnp.maximum(h, 0.0).astype(jnp.bfloat16)

    h = jnp.dot(h, w2_ref[...], preferred_element_type=jnp.float32) + b2_ref[...]
    h = jnp.maximum(h, 0.0).astype(jnp.bfloat16)

    # Final layer runs at a lane-dense padded N=128 on the MXU, but only the
    # real out_dim lanes (o_ref.shape[-1] == 2) are stored, keeping the output
    # HBM stream at 8 B/row instead of a 64x-amplified padded slab.
    out = jnp.dot(h, w3_ref[...], preferred_element_type=jnp.float32) + b3_ref[...]
    o_ref[...] = out[:, :o_ref.shape[-1]].astype(o_ref.dtype)


def prepare_params(params, *, lane_pad=128):
    """One-time weight prep (do NOT call per forward).

    Casts weights to bf16 and zero-pads the 2-wide final layer to `lane_pad`
    output lanes so the last matmul is lane-dense on the MXU.  Biases stay f32.
    Returns a flat tuple ready for `mlp_forward`.
    """
    (w0, b0), (w1, b1), (w2, b2), (w3, b3) = params
    out_dim = w3.shape[1]
    padded_out = _round_up(max(out_dim, lane_pad), lane_pad)
    w3p = jnp.zeros((w3.shape[0], padded_out), w3.dtype).at[:, :out_dim].set(w3)
    b3p = jnp.zeros((1, padded_out), b3.dtype).at[:, :out_dim].set(b3)
    return (w0.astype(jnp.bfloat16), b0.astype(jnp.float32),
            w1.astype(jnp.bfloat16), b1.astype(jnp.float32),
            w2.astype(jnp.bfloat16), b2.astype(jnp.float32),
            w3p.astype(jnp.bfloat16), b3p.astype(jnp.float32))


def mlp_forward(x, prepared, *, out_dim=2, batch_tile=512):
    """x: (B, input_dim) float32; prepared: output of prepare_params()."""
    B, in_dim = x.shape
    w0, b0, w1, b1, w2, b2, w3p, b3p = prepared
    emb, h1, h2 = w0.shape[1], w1.shape[1], w2.shape[1]
    padded_out = w3p.shape[1]

    # ---- Batch tiling: multiple of 8 sublanes, capped by the problem size. ---
    bt = _round_up(min(batch_tile, _round_up(B, 8)), 8)
    # Megacore guard (v7x has 2 TensorCores): ensure >= 2 grid steps when
    # possible so a single-tile batch doesn't pin all work to one core.
    while bt > 8 and pl.cdiv(B, bt) < 2:
        bt = _round_up(bt // 2, 8)
    grid = (pl.cdiv(B, bt),)

    def param_spec(arr):
        # Whole (small) parameter tensor, constant block index -> DMA'd once
        # and held resident in VMEM across the batch grid.
        return pl.BlockSpec(arr.shape, lambda i: (0, 0))

    flops = 2 * B * (in_dim * emb + emb * h1 + h1 * h2 + h2 * padded_out)
    bytes_accessed = int(
        x.size * x.dtype.itemsize
        + sum(a.size * a.dtype.itemsize for a in prepared)
        + B * out_dim * 4)

    out = pl.pallas_call(
        mlp_kernel,
        out_shape=jax.ShapeDtypeStruct((B, out_dim), jnp.float32),
        grid_spec=pltpu.PrefetchScalarGridSpec(
            num_scalar_prefetch=0,
            grid=grid,
            in_specs=[
                pl.BlockSpec((bt, in_dim), lambda i: (i, 0)),
                param_spec(w0), param_spec(b0),
                param_spec(w1), param_spec(b1),
                param_spec(w2), param_spec(b2),
                param_spec(w3p), param_spec(b3p),
            ],
            out_specs=pl.BlockSpec((bt, out_dim), lambda i: (i, 0)),
        ),
        compiler_params=pltpu.CompilerParams(
            dimension_semantics=("parallel",),
        ),
        cost_estimate=pl.CostEstimate(
            flops=flops, transcendentals=0, bytes_accessed=bytes_accessed),
    )(x, w0, b0, w1, b1, w2, b2, w3p, b3p)
    return out


def init_params(key, input_dim, embedding_dim):
    """Deterministic synthetic init (PyTorch-like uniform fan-in scale)."""
    dims = [(input_dim, embedding_dim),
            (embedding_dim, 512),
            (512, 256),
            (256, 2)]
    params = []
    for (fan_in, fan_out) in dims:
        key, kw, kb = jax.random.split(key, 3)
        bound = 1.0 / jnp.sqrt(fan_in)
        # stored as (in, out) == PyTorch weight.T
        W = jax.random.uniform(kw, (fan_in, fan_out), jnp.float32, -bound, bound)
        b = jax.random.uniform(kb, (1, fan_out), jnp.float32, -bound, bound)
        params.append((W, b))
    return params


def mlp_reference(x, params):
    """Pure-JAX reference in full f32 (PyTorch forward semantics)."""
    h = x
    for idx, (W, b) in enumerate(params):
        h = h @ W + b
        if idx < len(params) - 1:
            h = jnp.maximum(h, 0.0)
    return h


if __name__ == "__main__":
    key = jax.random.PRNGKey(0)
    k_x, k_p = jax.random.split(key)

    batch, input_dim, embedding_dim = 16, 32, 64
    x = jax.random.normal(k_x, (batch, input_dim), jnp.float32)
    params = init_params(k_p, input_dim, embedding_dim)

    # One-time weight prep (bf16 cast + lane padding), kept out of the hot path.
    prepared = prepare_params(params)

    fwd = jax.jit(functools.partial(mlp_forward, out_dim=2, batch_tile=512))
    out = jax.block_until_ready(fwd(x, prepared))

    ref = mlp_reference(x, params)
    assert out.shape == (batch, 2), out.shape
    # bf16 MXU operands with f32 accumulation -> loosen the tolerance vs f32 ref.
    assert jnp.allclose(out, ref, atol=5e-2, rtol=5e-2), "mismatch vs reference"

    print("KERNEL_OK")
</pallas_src>

<mosaic_0001>
module attributes {stable_mosaic.version = 11 : i64} {
  func.func @mlp_kernel(%arg0: i32, %arg1: memref<8x32xf32, #tpu.memory_space<vmem>>, %arg2: memref<32x64xbf16, #tpu.memory_space<vmem>>, %arg3: memref<1x64xf32, #tpu.memory_space<vmem>>, %arg4: memref<64x512xbf16, #tpu.memory_space<vmem>>, %arg5: memref<1x512xf32, #tpu.memory_space<vmem>>, %arg6: memref<512x256xbf16, #tpu.memory_space<vmem>>, %arg7: memref<1x256xf32, #tpu.memory_space<vmem>>, %arg8: memref<256x128xbf16, #tpu.memory_space<vmem>>, %arg9: memref<1x128xf32, #tpu.memory_space<vmem>>, %arg10: memref<8x2xf32, #tpu.memory_space<vmem>>) attributes {dimension_semantics = [#tpu.dimension_semantics<parallel>], iteration_bounds = array<i64: 2>, scalar_prefetch = 0 : i64, scratch_operands = 0 : i64, tpu.core_type = #tpu.core_type<tc>, window_params = [{transform_indices = @transform_0, window_bounds = array<i64: 8, 32>}, {pipeline_mode = #tpu.pipeline_mode<synchronous>, transform_indices = @transform_1, window_bounds = array<i64: 32, 64>}, {pipeline_mode = #tpu.pipeline_mode<synchronous>, transform_indices = @transform_2, window_bounds = array<i64: 1, 64>}, {pipeline_mode = #tpu.pipeline_mode<synchronous>, transform_indices = @transform_3, window_bounds = array<i64: 64, 512>}, {pipeline_mode = #tpu.pipeline_mode<synchronous>, transform_indices = @transform_4, window_bounds = array<i64: 1, 512>}, {pipeline_mode = #tpu.pipeline_mode<synchronous>, transform_indices = @transform_5, window_bounds = array<i64: 512, 256>}, {pipeline_mode = #tpu.pipeline_mode<synchronous>, transform_indices = @transform_6, window_bounds = array<i64: 1, 256>}, {pipeline_mode = #tpu.pipeline_mode<synchronous>, transform_indices = @transform_7, window_bounds = array<i64: 256, 128>}, {pipeline_mode = #tpu.pipeline_mode<synchronous>, transform_indices = @transform_8, window_bounds = array<i64: 1, 128>}, {transform_indices = @transform_9, window_bounds = array<i64: 8, 2>}]} {
    %c0 = arith.constant 0 : index
    %c0_0 = arith.constant 0 : index
    %0 = vector.load %arg1[%c0, %c0_0] : memref<8x32xf32, #tpu.memory_space<vmem>>, vector<8x32xf32>
    %1 = arith.truncf %0 : vector<8x32xf32> to vector<8x32xbf16>
    %c0_1 = arith.constant 0 : index
    %c0_2 = arith.constant 0 : index
    %2 = vector.load %arg2[%c0_1, %c0_2] : memref<32x64xbf16, #tpu.memory_space<vmem>>, vector<32x64xbf16>
    %cst = arith.constant dense<0.000000e+00> : vector<8x64xf32>
    %3 = tpu.matmul %1, %2, %cst {dimension_numbers = #tpu.dot_dimension_numbers<[1], [0], [0], [1], [0, 0, 1, 1], [], []>} : vector<8x32xbf16>, vector<32x64xbf16>, vector<8x64xf32> -> vector<8x64xf32>
    %c0_3 = arith.constant 0 : index
    %c0_4 = arith.constant 0 : index
    %4 = vector.load %arg3[%c0_3, %c0_4] : memref<1x64xf32, #tpu.memory_space<vmem>>, vector<1x64xf32>
    %5 = vector.broadcast %4 : vector<1x64xf32> to vector<8x64xf32>
    %6 = arith.addf %3, %5 : vector<8x64xf32>
    %cst_5 = arith.constant 0.000000e+00 : f32
    %7 = vector.broadcast %cst_5 : f32 to vector<8x64xf32>
    %8 = arith.maximumf %6, %7 : vector<8x64xf32>
    %9 = arith.truncf %8 : vector<8x64xf32> to vector<8x64xbf16>
    %c0_6 = arith.constant 0 : index
    %c0_7 = arith.constant 0 : index
    %10 = vector.load %arg4[%c0_6, %c0_7] : memref<64x512xbf16, #tpu.memory_space<vmem>>, vector<64x512xbf16>
    %cst_8 = arith.constant dense<0.000000e+00> : vector<8x512xf32>
    %11 = tpu.matmul %9, %10, %cst_8 {dimension_numbers = #tpu.dot_dimension_numbers<[1], [0], [0], [1], [0, 0, 1, 1], [], []>} : vector<8x64xbf16>, vector<64x512xbf16>, vector<8x512xf32> -> vector<8x512xf32>
    %c0_9 = arith.constant 0 : index
    %c0_10 = arith.constant 0 : index
    %12 = vector.load %arg5[%c0_9, %c0_10] : memref<1x512xf32, #tpu.memory_space<vmem>>, vector<1x512xf32>
    %13 = vector.broadcast %12 : vector<1x512xf32> to vector<8x512xf32>
    %14 = arith.addf %11, %13 : vector<8x512xf32>
    %cst_11 = arith.constant 0.000000e+00 : f32
    %15 = vector.broadcast %cst_11 : f32 to vector<8x512xf32>
    %16 = arith.maximumf %14, %15 : vector<8x512xf32>
    %17 = arith.truncf %16 : vector<8x512xf32> to vector<8x512xbf16>
    %c0_12 = arith.constant 0 : index
    %c0_13 = arith.constant 0 : index
    %18 = vector.load %arg6[%c0_12, %c0_13] : memref<512x256xbf16, #tpu.memory_space<vmem>>, vector<512x256xbf16>
    %cst_14 = arith.constant dense<0.000000e+00> : vector<8x256xf32>
    %19 = tpu.matmul %17, %18, %cst_14 {dimension_numbers = #tpu.dot_dimension_numbers<[1], [0], [0], [1], [0, 0, 1, 1], [], []>} : vector<8x512xbf16>, vector<512x256xbf16>, vector<8x256xf32> -> vector<8x256xf32>
    %c0_15 = arith.constant 0 : index
    %c0_16 = arith.constant 0 : index
    %20 = vector.load %arg7[%c0_15, %c0_16] : memref<1x256xf32, #tpu.memory_space<vmem>>, vector<1x256xf32>
    %21 = vector.broadcast %20 : vector<1x256xf32> to vector<8x256xf32>
    %22 = arith.addf %19, %21 : vector<8x256xf32>
    %cst_17 = arith.constant 0.000000e+00 : f32
    %23 = vector.broadcast %cst_17 : f32 to vector<8x256xf32>
    %24 = arith.maximumf %22, %23 : vector<8x256xf32>
    %25 = arith.truncf %24 : vector<8x256xf32> to vector<8x256xbf16>
    %c0_18 = arith.constant 0 : index
    %c0_19 = arith.constant 0 : index
    %26 = vector.load %arg8[%c0_18, %c0_19] : memref<256x128xbf16, #tpu.memory_space<vmem>>, vector<256x128xbf16>
    %cst_20 = arith.constant dense<0.000000e+00> : vector<8x128xf32>
    %27 = tpu.matmul %25, %26, %cst_20 {dimension_numbers = #tpu.dot_dimension_numbers<[1], [0], [0], [1], [0, 0, 1, 1], [], []>} : vector<8x256xbf16>, vector<256x128xbf16>, vector<8x128xf32> -> vector<8x128xf32>
    %c0_21 = arith.constant 0 : index
    %c0_22 = arith.constant 0 : index
    %28 = vector.load %arg9[%c0_21, %c0_22] : memref<1x128xf32, #tpu.memory_space<vmem>>, vector<1x128xf32>
    %29 = vector.broadcast %28 : vector<1x128xf32> to vector<8x128xf32>
    %30 = arith.addf %27, %29 : vector<8x128xf32>
    %31 = vector.extract_strided_slice %30 {offsets = [0, 0], sizes = [8, 2], strides = [1, 1]} : vector<8x128xf32> to vector<8x2xf32>
    %c0_23 = arith.constant 0 : index
    %c0_24 = arith.constant 0 : index
    %32 = vector.load %arg10[%c0_23, %c0_24] : memref<8x2xf32, #tpu.memory_space<vmem>>, vector<8x2xf32>
    tpu.vector_store %arg10[%c0_23, %c0_24], %31 {strides = array<i32>} : memref<8x2xf32, #tpu.memory_space<vmem>>, vector<8x2xf32>,
    return
  }
  func.func @transform_0(%arg0: i32) -> (i32, i32) {
    %c0_i32 = arith.constant 0 : i32
    %c0_i32_0 = arith.constant 0 : i32
    return %arg0, %c0_i32 : i32, i32
  }
  func.func @transform_1(%arg0: i32) -> (i32, i32) {
    %c0_i32 = arith.constant 0 : i32
    %c0_i32_0 = arith.constant 0 : i32
    %c0_i32_1 = arith.constant 0 : i32
    return %c0_i32, %c0_i32_0 : i32, i32
  }
  func.func @transform_2(%arg0: i32) -> (i32, i32) {
    %c0_i32 = arith.constant 0 : i32
    %c0_i32_0 = arith.constant 0 : i32
    %c0_i32_1 = arith.constant 0 : i32
    return %c0_i32, %c0_i32_0 : i32, i32
  }
  func.func @transform_3(%arg0: i32) -> (i32, i32) {
    %c0_i32 = arith.constant 0 : i32
    %c0_i32_0 = arith.constant 0 : i32
    %c0_i32_1 = arith.constant 0 : i32
    return %c0_i32, %c0_i32_0 : i32, i32
  }
  func.func @transform_4(%arg0: i32) -> (i32, i32) {
    %c0_i32 = arith.constant 0 : i32
    %c0_i32_0 = arith.constant 0 : i32
    %c0_i32_1 = arith.constant 0 : i32
    return %c0_i32, %c0_i32_0 : i32, i32
  }
  func.func @transform_5(%arg0: i32) -> (i32, i32) {
    %c0_i32 = arith.constant 0 : i32
    %c0_i32_0 = arith.constant 0 : i32
    %c0_i32_1 = arith.constant 0 : i32
    return %c0_i32, %c0_i32_0 : i32, i32
  }
  func.func @transform_6(%arg0: i32) -> (i32, i32) {
    %c0_i32 = arith.constant 0 : i32
    %c0_i32_0 = arith.constant 0 : i32
    %c0_i32_1 = arith.constant 0 : i32
    return %c0_i32, %c0_i32_0 : i32, i32
  }
  func.func @transform_7(%arg0: i32) -> (i32, i32) {
    %c0_i32 = arith.constant 0 : i32
    %c0_i32_0 = arith.constant 0 : i32
    %c0_i32_1 = arith.constant 0 : i32
    return %c0_i32, %c0_i32_0 : i32, i32
  }
  func.func @transform_8(%arg0: i32) -> (i32, i32) {
    %c0_i32 = arith.constant 0 : i32
    %c0_i32_0 = arith.constant 0 : i32
    %c0_i32_1 = arith.constant 0 : i32
    return %c0_i32, %c0_i32_0 : i32, i32
  }
  func.func @transform_9(%arg0: i32) -> (i32, i32) {
    %c0_i32 = arith.constant 0 : i32
    %c0_i32_0 = arith.constant 0 : i32
    return %arg0, %c0_i32 : i32, i32
  }
}

</mosaic_0001>

<llo_original>
// kernel: mlp_forward.1
$region0: #{mlp_forward.1}
  #allocation0 [shape = 'u32[]', space=smem, size = 0x4, offset = 0x4, fixed_abs, tag = 'smem constant byte address 0x4 - core index']
  #allocation1 [shape = 'u32[72,128]{1,0:T(1,128)}', space=vmem, size = 0x9000, scoped, tag = 'internal scratch']
  %s0 = inlined_call_operand.hbm [shape: f32[16,32], index: 0, kind: input, shape index: {}]
  %s1 = inlined_call_operand.hbm [shape: bf16[32,64], index: 1, kind: input, shape index: {}]
  %s2 = inlined_call_operand.vmem [shape: f32[1,64], index: 2, kind: input, shape index: {}]
  %s3 = inlined_call_operand.hbm [shape: bf16[64,512], index: 3, kind: input, shape index: {}]
  %s4 = inlined_call_operand.hbm [shape: f32[1,512], index: 4, kind: input, shape index: {}]
  %s5 = inlined_call_operand.hbm [shape: bf16[512,256], index: 5, kind: input, shape index: {}]
  %s6 = inlined_call_operand.vmem [shape: f32[1,256], index: 6, kind: input, shape index: {}]
  %s7 = inlined_call_operand.hbm [shape: bf16[256,128], index: 7, kind: input, shape index: {}]
  %s8 = inlined_call_operand.vmem [shape: f32[1,128], index: 8, kind: input, shape index: {}]
  %s9 = inlined_call_operand.vmem [shape: f32[16,2], index: 9, kind: output, shape index: {}]
  %s10 = sld [smem:[#allocation0]]
  $region93: #{mlp_forward.1} parent=0
    _
  %s12 = ssub.s32 1, %s10
  %s13 = scalar_select 0, %s12, %s10
  $region1: #{mlp_forward.1} parent=0
    #allocation2 [shape = 'u8[8192]{0}', space=vmem, size = 0x2000, scoped, tag = 'input window, operand 0']
    #allocation3 [shape = 's32[2]{0}', space=sflag, size = 0x8, scoped, tag = 'scoped memory for mlp_forward.1']
    #allocation4 [shape = 'u8[8192]{0}', space=vmem, size = 0x2000, scoped, tag = 'input window, operand 1, single buffered']
    #allocation5 [shape = 's32[1]{0}', space=sflag, size = 0x4, scoped, tag = 'scoped memory for mlp_forward.1']
    #allocation6 [shape = 'u8[65536]{0}', space=vmem, size = 0x10000, scoped, tag = 'input window, operand 3, single buffered']
    #allocation7 [shape = 'u8[2048]{0}', space=vmem, size = 0x800, scoped, tag = 'input window, operand 4, single buffered']
    #allocation8 [shape = 's32[1]{0}', space=sflag, size = 0x4, scoped, tag = 'scoped memory for mlp_forward.1']
    #allocation9 [shape = 'u8[262144]{0}', space=vmem, size = 0x40000, scoped, tag = 'input window, operand 5, single buffered']
    #allocation10 [shape = 'u8[65536]{0}', space=vmem, size = 0x10000, scoped, tag = 'input window, operand 7, single buffered']
    #allocation11 [shape = 's32[1]{0}', space=sflag, size = 0x4, scoped, tag = 'scoped memory for mlp_forward.1']
    %14 = vsyncpa [#allocation3], 0
    %s15 = scalar_lea.sflag [#allocation3], 1
    %16 = vsyncpa %s15, 0
    %17 = vsyncpa [#allocation5], 0
    %18 = vsyncpa [#allocation8], 0
    %19 = vsyncpa [#allocation11], 0
    loop: start=0, step=1, limit=4
    $region2: #{mlp_forward.1} parent=1 // loop_pre_header
      _
    $region3: #{mlp_forward.1} parent=1 // loop_header
      %s21 = sphi 0, %s25
      %p22 = scmp.ge.s32.totalorder %s21, 4
      %s31 = sphi 0, %s33
      %s34 = sphi 0, %s31
      %s35 = sphi 0, %s34
      %s51 = sphi 0, %s35
      %s55 = sphi 0, %s55
      %s57 = sphi 0, %s55
      %s58 = sphi 0, %s57
      %s72 = sphi 0, %s58
      %s76 = sphi 0, %s76
      %s78 = sphi 0, %s76
      %s79 = sphi 0, %s78
      %s93 = sphi 0, %s79
      %s97 = sphi 0, %s97
      %s99 = sphi 0, %s97
      %s100 = sphi 0, %s99
      %s114 = sphi 0, %s100
      %s118 = sphi 0, %s118
      %s120 = sphi 0, %s118
      %s121 = sphi 0, %s120
      %s135 = sphi 0, %s121
      %s139 = sphi 0, %s139
      %s141 = sphi 0, %s139
      %s142 = sphi 0, %s141
      %s156 = sphi 0, %s142
      %s160 = sphi 0, %s160
      %s162 = sphi 0, %s160
      %s163 = sphi 0, %s162
      %s177 = sphi 0, %s163
      %s181 = sphi 0, %s181
      %s183 = sphi 0, %s181
      %s184 = sphi 0, %s183
      %s198 = sphi 0, %s184
      %s202 = sphi 0, %s202
      %s204 = sphi 0, %s202
      %s205 = sphi 0, %s204
      %s219 = sphi 0, %s205
      %s225 = sphi 0, %s227
      %s228 = sphi 0, %s225
      %s229 = sphi 0, %s228
      %s245 = sphi 0, %s229
    $region4: #{mlp_forward.1} parent=1 // loop_header_branch
      %24 = sbr.rel (%p22) target = $region8
    $region5: #{mlp_forward.1} parent=1 // loop_body
      %s26 = ssub.s32 %s21, 1
      %s27 = ssub.s32 %s21, 2
      %s28 = sadd.s32 %s21, 1
      %s29 = ssub.s32 %s21, %s28
      %p30 = scmp.eq.s32.totalorder %s29, 0
      %s32 = sadd.s32 %s31, 1
      %s33 = scalar_select %p30, %s31, %s32
      %p36 = pneg %p30
      %p37 = scmp.eq.s32.totalorder %s21, 1
      %p38 = por %p36, %p37
      %p39 = scmp.ne.s32.totalorder %s31, %s34
      %p40 = scmp.eq.s32.totalorder %s21, 0
      %p41 = por %p39, %p40
      %p42 = scmp.ne.s32.totalorder %s31, %s34
      %p43 = scmp.eq.s32.totalorder %s26, 1
      %p44 = por %p42, %p43
      %p45 = scmp.ne.s32.totalorder %s34, %s35
      %p46 = scmp.eq.s32.totalorder %s26, 0
      %p47 = por %p45, %p46
      %p48 = scmp.ne.s32.totalorder %s34, %s35
      %p49 = scmp.eq.s32.totalorder %s27, 1
      %p50 = por %p48, %p49
      %p52 = scmp.ne.s32.totalorder %s35, %s51
      %p53 = scmp.eq.s32.totalorder %s27, 0
      %p54 = por %p52, %p53
      %s56 = sadd.s32 %s55, 1
      %p59 = scmp.eq.s32.totalorder %s21, 1
      %p60 = scmp.ne.s32.totalorder %s55, %s57
      %p61 = scmp.eq.s32.totalorder %s21, 0
      %p62 = por %p60, %p61
      %p63 = scmp.ne.s32.totalorder %s55, %s57
      %p64 = scmp.eq.s32.totalorder %s26, 1
      %p65 = por %p63, %p64
      %p66 = scmp.ne.s32.totalorder %s57, %s58
      %p67 = scmp.eq.s32.totalorder %s26, 0
      %p68 = por %p66, %p67
      %p69 = scmp.ne.s32.totalorder %s57, %s58
      %p70 = scmp.eq.s32.totalorder %s27, 1
      %p71 = por %p69, %p70
      %p73 = scmp.ne.s32.totalorder %s58, %s72
      %p74 = scmp.eq.s32.totalorder %s27, 0
      %p75 = por %p73, %p74
      %s77 = sadd.s32 %s76, 1
      %p80 = scmp.eq.s32.totalorder %s21, 1
      %p81 = scmp.ne.s32.totalorder %s76, %s78
      %p82 = scmp.eq.s32.totalorder %s21, 0
      %p83 = por %p81, %p82
      %p84 = scmp.ne.s32.totalorder %s76, %s78
      %p85 = scmp.eq.s32.totalorder %s26, 1
      %p86 = por %p84, %p85
      %p87 = scmp.ne.s32.totalorder %s78, %s79
      %p88 = scmp.eq.s32.totalorder %s26, 0
      %p89 = por %p87, %p88
      %p90 = scmp.ne.s32.totalorder %s78, %s79
      %p91 = scmp.eq.s32.totalorder %s27, 1
      %p92 = por %p90, %p91
      %p94 = scmp.ne.s32.totalorder %s79, %s93
      %p95 = scmp.eq.s32.totalorder %s27, 0
      %p96 = por %p94, %p95
      %s98 = sadd.s32 %s97, 1
      %p101 = scmp.eq.s32.totalorder %s21, 1
      %p102 = scmp.ne.s32.totalorder %s97, %s99
      %p103 = scmp.eq.s32.totalorder %s21, 0
      %p104 = por %p102, %p103
      %p105 = scmp.ne.s32.totalorder %s97, %s99
      %p106 = scmp.eq.s32.totalorder %s26, 1
      %p107 = por %p105, %p106
      %p108 = scmp.ne.s32.totalorder %s99, %s100
      %p109 = scmp.eq.s32.totalorder %s26, 0
      %p110 = por %p108, %p109
      %p111 = scmp.ne.s32.totalorder %s99, %s100
      %p112 = scmp.eq.s32.totalorder %s27, 1
      %p113 = por %p111, %p112
      %p115 = scmp.ne.s32.totalorder %s100, %s114
      %p116 = scmp.eq.s32.totalorder %s27, 0
      %p117 = por %p115, %p116
      %s119 = sadd.s32 %s118, 1
      %p122 = scmp.eq.s32.totalorder %s21, 1
      %p123 = scmp.ne.s32.totalorder %s118, %s120
      %p124 = scmp.eq.s32.totalorder %s21, 0
      %p125 = por %p123, %p124
      %p126 = scmp.ne.s32.totalorder %s118, %s120
      %p127 = scmp.eq.s32.totalorder %s26, 1
      %p128 = por %p126, %p127
      %p129 = scmp.ne.s32.totalorder %s120, %s121
      %p130 = scmp.eq.s32.totalorder %s26, 0
      %p131 = por %p129, %p130
      %p132 = scmp.ne.s32.totalorder %s120, %s121
      %p133 = scmp.eq.s32.totalorder %s27, 1
      %p134 = por %p132, %p133
      %p136 = scmp.ne.s32.totalorder %s121, %s135
      %p137 = scmp.eq.s32.totalorder %s27, 0
      %p138 = por %p136, %p137
      %s140 = sadd.s32 %s139, 1
      %p143 = scmp.eq.s32.totalorder %s21, 1
      %p144 = scmp.ne.s32.totalorder %s139, %s141
      %p145 = scmp.eq.s32.totalorder %s21, 0
      %p146 = por %p144, %p145
      %p147 = scmp.ne.s32.totalorder %s139, %s141
      %p148 = scmp.eq.s32.totalorder %s26, 1
      %p149 = por %p147, %p148
      %p150 = scmp.ne.s32.totalorder %s141, %s142
      %p151 = scmp.eq.s32.totalorder %s26, 0
      %p152 = por %p150, %p151
      %p153 = scmp.ne.s32.totalorder %s141, %s142
      %p154 = scmp.eq.s32.totalorder %s27, 1
      %p155 = por %p153, %p154
      %p157 = scmp.ne.s32.totalorder %s142, %s156
      %p158 = scmp.eq.s32.totalorder %s27, 0
      %p159 = por %p157, %p158
      %s161 = sadd.s32 %s160, 1
      %p164 = scmp.eq.s32.totalorder %s21, 1
      %p165 = scmp.ne.s32.totalorder %s160, %s162
      %p166 = scmp.eq.s32.totalorder %s21, 0
      %p167 = por %p165, %p166
      %p168 = scmp.ne.s32.totalorder %s160, %s162
      %p169 = scmp.eq.s32.totalorder %s26, 1
      %p170 = por %p168, %p169
      %p171 = scmp.ne.s32.totalorder %s162, %s163
      %p172 = scmp.eq.s32.totalorder %s26, 0
      %p173 = por %p171, %p172
      %p174 = scmp.ne.s32.totalorder %s162, %s163
      %p175 = scmp.eq.s32.totalorder %s27, 1
      %p176 = por %p174, %p175
      %p178 = scmp.ne.s32.totalorder %s163, %s177
      %p179 = scmp.eq.s32.totalorder %s27, 0
      %p180 = por %p178, %p179
      %s182 = sadd.s32 %s181, 1
      %p185 = scmp.eq.s32.totalorder %s21, 1
      %p186 = scmp.ne.s32.totalorder %s181, %s183
      %p187 = scmp.eq.s32.totalorder %s21, 0
      %p188 = por %p186, %p187
      %p189 = scmp.ne.s32.totalorder %s181, %s183
      %p190 = scmp.eq.s32.totalorder %s26, 1
      %p191 = por %p189, %p190
      %p192 = scmp.ne.s32.totalorder %s183, %s184
      %p193 = scmp.eq.s32.totalorder %s26, 0
      %p194 = por %p192, %p193
      %p195 = scmp.ne.s32.totalorder %s183, %s184
      %p196 = scmp.eq.s32.totalorder %s27, 1
      %p197 = por %p195, %p196
      %p199 = scmp.ne.s32.totalorder %s184, %s198
      %p200 = scmp.eq.s32.totalorder %s27, 0
      %p201 = por %p199, %p200
      %s203 = sadd.s32 %s202, 1
      %p206 = scmp.eq.s32.totalorder %s21, 1
      %p207 = scmp.ne.s32.totalorder %s202, %s204
      %p208 = scmp.eq.s32.totalorder %s21, 0
      %p209 = por %p207, %p208
      %p210 = scmp.ne.s32.totalorder %s202, %s204
      %p211 = scmp.eq.s32.totalorder %s26, 1
      %p212 = por %p210, %p211
      %p213 = scmp.ne.s32.totalorder %s204, %s205
      %p214 = scmp.eq.s32.totalorder %s26, 0
      %p215 = por %p213, %p214
      %p216 = scmp.ne.s32.totalorder %s204, %s205
      %p217 = scmp.eq.s32.totalorder %s27, 1
      %p218 = por %p216, %p217
      %p220 = scmp.ne.s32.totalorder %s205, %s219
      %p221 = scmp.eq.s32.totalorder %s27, 0
      %p222 = por %p220, %p221
      %s223 = ssub.s32 %s21, %s28
      %p224 = scmp.eq.s32.totalorder %s223, 0
      %s226 = sadd.s32 %s225, 1
      %s227 = scalar_select %p224, %s225, %s226
      %p230 = pneg %p224
      %p231 = scmp.eq.s32.totalorder %s21, 1
      %p232 = por %p230, %p231
      %p233 = scmp.ne.s32.totalorder %s225, %s228
      %p234 = scmp.eq.s32.totalorder %s21, 0
      %p235 = por %p233, %p234
      %p236 = scmp.ne.s32.totalorder %s225, %s228
      %p237 = scmp.eq.s32.totalorder %s26, 1
      %p238 = por %p236, %p237
      %p239 = scmp.ne.s32.totalorder %s228, %s229
      %p240 = scmp.eq.s32.totalorder %s26, 0
      %p241 = por %p239, %p240
      %p242 = scmp.ne.s32.totalorder %s228, %s229
      %p243 = scmp.eq.s32.totalorder %s27, 1
      %p244 = por %p242, %p243
      %p246 = scmp.ne.s32.totalorder %s229, %s245
      %p247 = scmp.eq.s32.totalorder %s27, 0
      %p248 = por %p246, %p247
      %p249 = scmp.le.s32.totalorder 1, %s21
      %p250 = scmp.lt.s32.totalorder %s21, 3
      %p251 = pnand %p249, %p250
      %p252 = pneg %p251
      // Predicated region
      $region9: #{mlp_forward.1} parent=5 // pred_check
        _
      $region10: #{mlp_forward.1} parent=5 // pred_check_branch
        %254 = sbr.rel (%p251) target = $region12
      $region11: #{mlp_forward.1} parent=5 // pred_region
        %s255 = ssub.s32 %s21, 1
        // Predicated region
        $region13: #{mlp_forward.1} parent=11 // pred_check
          %p256 = pneg %p68
        $region14: #{mlp_forward.1} parent=11 // pred_check_branch
          %258 = sbr.rel (%p256) target = $region16
        $region15: #{mlp_forward.1} parent=11 // pred_region
          %260 = vsyncadd [#allocation5], 0
          %s261 = sshll.u32 %s1, 4
          %s262 = int_to_ptr.hbm [resolvable:$true] %s261
          %s263 = sshll.u32 [#allocation4], 4
          %s264 = int_to_ptr.vmem [resolvable:$true] %s263
          %269 = dma.hbm_to_vmem [thread:$0]  %s262, 256, %s264, [#allocation5], 64, 64, 4
        $region16: #{mlp_forward.1} parent=11 // pred_fallthru
          _
        // Predicated region
        $region17: #{mlp_forward.1} parent=11 // pred_check
          %p270 = pneg %p89
        $region18: #{mlp_forward.1} parent=11 // pred_check_branch
          %272 = sbr.rel (%p270) target = $region20
        $region19: #{mlp_forward.1} parent=11 // pred_region
          _
        $region20: #{mlp_forward.1} parent=11 // pred_fallthru
          _
        // Predicated region
        $region21: #{mlp_forward.1} parent=11 // pred_check
          %p273 = pneg %p110
        $region22: #{mlp_forward.1} parent=11 // pred_check_branch
          %275 = sbr.rel (%p273) target = $region24
        $region23: #{mlp_forward.1} parent=11 // pred_region
          %277 = vsyncadd [#allocation5], 0
          %s278 = sshll.u32 %s3, 4
          %s279 = int_to_ptr.hbm [resolvable:$true] %s278
          %s280 = sshll.u32 [#allocation6], 4
          %s281 = int_to_ptr.vmem [resolvable:$true] %s280
          %286 = dma.hbm_to_vmem [thread:$0]  %s279, 2048, %s281, [#allocation5], 256, 256, 16
        $region24: #{mlp_forward.1} parent=11 // pred_fallthru
          _
        // Predicated region
        $region25: #{mlp_forward.1} parent=11 // pred_check
          %p287 = pneg %p131
        $region26: #{mlp_forward.1} parent=11 // pred_check_branch
          %289 = sbr.rel (%p287) target = $region28
        $region27: #{mlp_forward.1} parent=11 // pred_region
          %291 = vsyncadd [#allocation8], 0
          %s293 = sshll.u32 %s4, 4
          %s294 = int_to_ptr.hbm [resolvable:$true] %s293
          %s295 = sshll.u32 [#allocation7], 4
          %s296 = int_to_ptr.vmem [resolvable:$true] %s295
          %298 = dma.hbm_to_vmem [thread:$0]  %s294, 64, %s296, [#allocation8]
        $region28: #{mlp_forward.1} parent=11 // pred_fallthru
          _
        // Predicated region
        $region29: #{mlp_forward.1} parent=11 // pred_check
          %p299 = pneg %p152
        $region30: #{mlp_forward.1} parent=11 // pred_check_branch
          %301 = sbr.rel (%p299) target = $region32
        $region31: #{mlp_forward.1} parent=11 // pred_region
          %303 = vsyncadd [#allocation8], 0
          %s304 = sshll.u32 %s5, 4
          %s305 = int_to_ptr.hbm [resolvable:$true] %s304
          %s306 = sshll.u32 [#allocation9], 4
          %s307 = int_to_ptr.vmem [resolvable:$true] %s306
          %312 = dma.hbm_to_vmem [thread:$0]  %s305, 8192, %s307, [#allocation8], 128, 128, 8
        $region32: #{mlp_forward.1} parent=11 // pred_fallthru
          _
        // Predicated region
        $region33: #{mlp_forward.1} parent=11 // pred_check
          %p313 = pneg %p173
        $region34: #{mlp_forward.1} parent=11 // pred_check_branch
          %315 = sbr.rel (%p313) target = $region36
        $region35: #{mlp_forward.1} parent=11 // pred_region
          _
        $region36: #{mlp_forward.1} parent=11 // pred_fallthru
          _
        // Predicated region
        $region37: #{mlp_forward.1} parent=11 // pred_check
          %p316 = pneg %p194
        $region38: #{mlp_forward.1} parent=11 // pred_check_branch
          %318 = sbr.rel (%p316) target = $region40
        $region39: #{mlp_forward.1} parent=11 // pred_region
          %320 = vsyncadd [#allocation11], 0
          %s321 = sshll.u32 %s7, 4
          %s322 = int_to_ptr.hbm [resolvable:$true] %s321
          %s323 = sshll.u32 [#allocation10], 4
          %s324 = int_to_ptr.vmem [resolvable:$true] %s323
          %329 = dma.hbm_to_vmem [thread:$0]  %s322, 2048, %s324, [#allocation11], 64, 64, 4
        $region40: #{mlp_forward.1} parent=11 // pred_fallthru
          _
        // Predicated region
        $region41: #{mlp_forward.1} parent=11 // pred_check
          %p330 = pneg %p215
        $region42: #{mlp_forward.1} parent=11 // pred_check_branch
          %332 = sbr.rel (%p330) target = $region44
        $region43: #{mlp_forward.1} parent=11 // pred_region
          _
        $region44: #{mlp_forward.1} parent=11 // pred_fallthru
          _
      $region12: #{mlp_forward.1} parent=5 // pred_fallthru
        _
      %p333 = scmp.lt.s32.totalorder %s21, 2
      // Predicated region
      $region45: #{mlp_forward.1} parent=5 // pred_check
        %p334 = pneg %p333
      $region46: #{mlp_forward.1} parent=5 // pred_check_branch
        %336 = sbr.rel (%p334) target = $region48
      $region47: #{mlp_forward.1} parent=5 // pred_region
        // Predicated region
        $region49: #{mlp_forward.1} parent=47 // pred_check
          %p337 = pneg %p41
        $region50: #{mlp_forward.1} parent=47 // pred_check_branch
          %339 = sbr.rel (%p337) target = $region52
        $region51: #{mlp_forward.1} parent=47 // pred_region
          %s340 = sand.u32 %s31, 1
          %s341 = scalar_lea.sflag [#allocation3], %s340
          %s342 = sand.u32 %s31, 1
          %s343 = smul.addr %s342, 8
          %s344 = scalar_lea.vmem [#allocation2], %s343
          %346 = vsyncadd %s341, 0
          %s347 = smul.addr %s21, 8
          %s348 = scalar_lea.hbm %s0, %s347
          %s350 = sshll.u32 %s348, 4
          %s351 = int_to_ptr.hbm [resolvable:$true] %s350
          %s352 = sshll.u32 %s344, 4
          %s353 = int_to_ptr.vmem [resolvable:$true] %s352
          %355 = dma.hbm_to_vmem [thread:$0]  %s351, 128, %s353, %s341
        $region52: #{mlp_forward.1} parent=47 // pred_fallthru
          _
      $region48: #{mlp_forward.1} parent=5 // pred_fallthru
        _
      %p356 = scmp.le.s32.totalorder 1, %s21
      %p357 = scmp.lt.s32.totalorder %s21, 3
      %p358 = pnand %p356, %p357
      %p359 = pneg %p358
      // Predicated region
      $region53: #{mlp_forward.1} parent=5 // pred_check
        _
      $region54: #{mlp_forward.1} parent=5 // pred_check_branch
        %361 = sbr.rel (%p358) target = $region56
      $region55: #{mlp_forward.1} parent=5 // pred_region
        %s362 = ssub.s32 %s21, 1
        %s363 = sand.u32 %s34, 1
        %s364 = scalar_lea.sflag [#allocation3], %s363
        %s365 = sand.u32 %s34, 1
        %s366 = smul.addr %s365, 8
        %s367 = scalar_lea.vmem [#allocation2], %s366
        // Predicated region
        $region57: #{mlp_forward.1} parent=55 // pred_check
          %p368 = pneg %p47
        $region58: #{mlp_forward.1} parent=55 // pred_check_branch
          %370 = sbr.rel (%p368) target = $region60
        $region59: #{mlp_forward.1} parent=55 // pred_region
          %372 = dma.done %s364, 128
        $region60: #{mlp_forward.1} parent=55 // pred_fallthru
          _
        // Predicated region
        $region61: #{mlp_forward.1} parent=55 // pred_check
          %p373 = pneg %p68
        $region62: #{mlp_forward.1} parent=55 // pred_check_branch
          %375 = sbr.rel (%p373) target = $region64
        $region63: #{mlp_forward.1} parent=55 // pred_region
          %377 = dma.done [#allocation5], 256
        $region64: #{mlp_forward.1} parent=55 // pred_fallthru
          _
        // Predicated region
        $region65: #{mlp_forward.1} parent=55 // pred_check
          %p378 = pneg %p110
        $region66: #{mlp_forward.1} parent=55 // pred_check_branch
          %380 = sbr.rel (%p378) target = $region68
        $region67: #{mlp_forward.1} parent=55 // pred_region
          %382 = dma.done [#allocation5], 2048
        $region68: #{mlp_forward.1} parent=55 // pred_fallthru
          _
        // Predicated region
        $region69: #{mlp_forward.1} parent=55 // pred_check
          %p383 = pneg %p131
        $region70: #{mlp_forward.1} parent=55 // pred_check_branch
          %385 = sbr.rel (%p383) target = $region72
        $region71: #{mlp_forward.1} parent=55 // pred_region
          %387 = dma.done [#allocation8], 64
        $region72: #{mlp_forward.1} parent=55 // pred_fallthru
          _
        // Predicated region
        $region73: #{mlp_forward.1} parent=55 // pred_check
          %p388 = pneg %p152
        $region74: #{mlp_forward.1} parent=55 // pred_check_branch
          %390 = sbr.rel (%p388) target = $region76
        $region75: #{mlp_forward.1} parent=55 // pred_region
          %392 = dma.done [#allocation8], 8192
        $region76: #{mlp_forward.1} parent=55 // pred_fallthru
          _
        // Predicated region
        $region77: #{mlp_forward.1} parent=55 // pred_check
          %p393 = pneg %p194
        $region78: #{mlp_forward.1} parent=55 // pred_check_branch
          %395 = sbr.rel (%p393) target = $region80
        $region79: #{mlp_forward.1} parent=55 // pred_region
          %397 = dma.done [#allocation11], 2048
        $region80: #{mlp_forward.1} parent=55 // pred_fallthru
          _
        %s398 = sand.u32 %s34, 1
        %s399 = scalar_lea.sflag [#allocation3], %s398
        %s400 = sand.u32 %s34, 1
        %s401 = smul.addr %s400, 8
        %s402 = scalar_lea.vmem [#allocation2], %s401
        %p403 = pneg %p47
        %p404 = pneg %p44
        %p405 = pneg %p68
        %p406 = pneg %p65
        %p407 = pneg %p89
        %p408 = pneg %p86
        %p409 = pneg %p110
        %p410 = pneg %p107
        %p411 = pneg %p131
        %p412 = pneg %p128
        %p413 = pneg %p152
        %p414 = pneg %p149
        %p415 = pneg %p173
        %p416 = pneg %p170
        %p417 = pneg %p194
        %p418 = pneg %p191
        %p419 = pneg %p215
        %p420 = pneg %p212
        %p421 = pneg %p241
        %p422 = pneg %p238
        %p423 = scmp.lt.s32.totalorder %s26, 1
        %s424 = scalar_select %p423, %s26, 1
        %s425 = smul.addr %s424, 8
        %s426 = scalar_lea.vmem %s9, %s425
        %p427 = scmp.lt.s32.totalorder %s26, 1
        %s428 = scalar_select %p427, %s26, 1
        %s429 = smul.addr %s428, 8
        %s430 = scalar_lea.vmem %s9, %s429
        %v432 = vld [vmem:[%s367] sm:$0xff]
        %v433 = vpack.c.bf16 %v432, %v432
        %v434 = vld [vmem:[#allocation4] sm:$0xf]
        %v435 = vld [vmem:[#allocation4 + $0x4] sm:$0xf]
        %v436 = vld [vmem:[#allocation4 + $0x8] sm:$0xf]
        %v437 = vld [vmem:[#allocation4 + $0xc] sm:$0xf]
        %v438 = vld [vmem:[%s2] sm:$0x1]
        %v440 = vperm.slane %v438, 0
        %v446 = vunpack.c.l.b16 %v434
        %v447 = vunpack.c.l.b16 %v435
        %v448 = vunpack.c.l.b16 %v436
        %v449 = vunpack.c.l.b16 %v437
        %v450 = vpack.c.b16 %v447, %v446
        %v451 = vpack.c.b16 %v449, %v448
        %vm454 = vcmask 261120
        %v456 = vsel %vm454, %v433, 0
        %458 = vmatpush.bf16.msra.mxu0 0
        %459 = vmatpush.bf16.msra.mxu0 0
        %460 = vmatpush.bf16.msra.mxu0 0
        %461 = vmatpush.bf16.msra.mxu0 0
        %462 = vmatpush.bf16.msra.mxu0 0
        %463 = vmatpush.bf16.msra.mxu0 0
        %464 = vmatpush.bf16.msra.mxu0 %v451
        %465 = vmatpush.bf16.msra.mxu0 %v450
        %466 = vmatmul.bf16.gmra.mxu0 %v456
        %v467 = vpop.f32.mrf.mxu0
        %v468 = vadd.f32 %v440, %v467
        %v469 = vpop.f32.mrf.mxu0
        %470 = vdwg.mxu0
        %v471 = vmax.f32 %v468, 0.0
        %v472 = vpack.c.bf16 %v471, %v471
        %v473 = vld [vmem:[#allocation6] sm:$0xff]
        %v474 = vld [vmem:[#allocation6 + $0x8] sm:$0xff]
        %v475 = vld [vmem:[#allocation6 + $0x10] sm:$0xff]
        %v476 = vld [vmem:[#allocation6 + $0x18] sm:$0xff]
        %v477 = vld [vmem:[#allocation6 + $0x20] sm:$0xff]
        %v478 = vld [vmem:[#allocation6 + $0x28] sm:$0xff]
        %v479 = vld [vmem:[#allocation6 + $0x30] sm:$0xff]
        %v480 = vld [vmem:[#allocation6 + $0x38] sm:$0xff]
        %v481 = vld [vmem:[#allocation6 + $0x40] sm:$0xff]
        %v482 = vld [vmem:[#allocation6 + $0x48] sm:$0xff]
        %v483 = vld [vmem:[#allocation6 + $0x50] sm:$0xff]
        %v484 = vld [vmem:[#allocation6 + $0x58] sm:$0xff]
        %v485 = vld [vmem:[#allocation6 + $0x60] sm:$0xff]
        %v486 = vld [vmem:[#allocation6 + $0x68] sm:$0xff]
        %v487 = vld [vmem:[#allocation6 + $0x70] sm:$0xff]
        %v488 = vld [vmem:[#allocation6 + $0x78] sm:$0xff]
        %v489 = vld [vmem:[#allocation7] sm:$0xf]
        %v491 = vperm.slane %v489, 0
        %v492 = vperm.slane %v489, 1
        %v493 = vperm.slane %v489, 2
        %v494 = vperm.slane %v489, 3
        %v515 = vunpack.c.l.b16 %v473
        %v516 = vunpack.c.h.b16 %v473
        %v517 = vunpack.c.l.b16 %v474
        %v518 = vunpack.c.h.b16 %v474
        %v519 = vunpack.c.l.b16 %v475
        %v520 = vunpack.c.h.b16 %v475
        %v521 = vunpack.c.l.b16 %v476
        %v522 = vunpack.c.h.b16 %v476
        %v523 = vunpack.c.l.b16 %v477
        %v524 = vunpack.c.h.b16 %v477
        %v525 = vunpack.c.l.b16 %v478
        %v526 = vunpack.c.h.b16 %v478
        %v527 = vunpack.c.l.b16 %v479
        %v528 = vunpack.c.h.b16 %v479
        %v529 = vunpack.c.l.b16 %v480
        %v530 = vunpack.c.h.b16 %v480
        %v531 = vunpack.c.l.b16 %v481
        %v532 = vunpack.c.h.b16 %v481
        %v533 = vunpack.c.l.b16 %v482
        %v534 = vunpack.c.h.b16 %v482
        %v535 = vunpack.c.l.b16 %v483
        %v536 = vunpack.c.h.b16 %v483
        %v537 = vunpack.c.l.b16 %v484
        %v538 = vunpack.c.h.b16 %v484
        %v539 = vunpack.c.l.b16 %v485
        %v540 = vunpack.c.h.b16 %v485
        %v541 = vunpack.c.l.b16 %v486
        %v542 = vunpack.c.h.b16 %v486
        %v543 = vunpack.c.l.b16 %v487
        %v544 = vunpack.c.h.b16 %v487
        %v545 = vunpack.c.l.b16 %v488
        %v546 = vunpack.c.h.b16 %v488
        %v547 = vpack.c.b16 %v519, %v515
        %v548 = vpack.c.b16 %v520, %v516
        %v549 = vpack.c.b16 %v521, %v517
        %v550 = vpack.c.b16 %v522, %v518
        %v551 = vpack.c.b16 %v527, %v523
        %v552 = vpack.c.b16 %v528, %v524
        %v553 = vpack.c.b16 %v529, %v525
        %v554 = vpack.c.b16 %v530, %v526
        %v555 = vpack.c.b16 %v535, %v531
        %v556 = vpack.c.b16 %v536, %v532
        %v557 = vpack.c.b16 %v537, %v533
        %v558 = vpack.c.b16 %v538, %v534
        %v559 = vpack.c.b16 %v543, %v539
        %v560 = vpack.c.b16 %v544, %v540
        %v561 = vpack.c.b16 %v545, %v541
        %v562 = vpack.c.b16 %v546, %v542
        %vm579 = vcmask 523264
        %v581 = vsel %vm579, %v472, 0
        %583 = vmatpush.bf16.msra.mxu0 0
        %584 = vmatpush.bf16.msra.mxu0 0
        %585 = vmatpush.bf16.msra.mxu0 0
        %586 = vmatpush.bf16.msra.mxu0 0
        %587 = vmatpush.bf16.msra.mxu0 %v559
        %588 = vmatpush.bf16.msra.mxu0 %v555
        %589 = vmatpush.bf16.msra.mxu0 %v551
        %590 = vmatpush.bf16.msra.mxu0 %v547
        %591 = vmatmul.bf16.gmra.mxu0 %v581
        %v592 = vpop.f32.mrf.mxu0
        %v593 = vadd.f32 %v491, %v592
        %v594 = vpop.f32.mrf.mxu0
        %595 = vdwg.mxu0
        %596 = vmatpush.bf16.msra.mxu0 0
        %597 = vmatpush.bf16.msra.mxu0 0
        %598 = vmatpush.bf16.msra.mxu0 0
        %599 = vmatpush.bf16.msra.mxu0 0
        %600 = vmatpush.bf16.msra.mxu0 %v560
        %601 = vmatpush.bf16.msra.mxu0 %v556
        %602 = vmatpush.bf16.msra.mxu0 %v552
        %603 = vmatpush.bf16.msra.mxu0 %v548
        %604 = vmatmul.bf16.gmra.mxu0 %v581
        %v605 = vpop.f32.mrf.mxu0
        %v606 = vadd.f32 %v492, %v605
        %v607 = vpop.f32.mrf.mxu0
        %608 = vdwg.mxu0
        %609 = vmatpush.bf16.msra.mxu0 0
        %610 = vmatpush.bf16.msra.mxu0 0
        %611 = vmatpush.bf16.msra.mxu0 0
        %612 = vmatpush.bf16.msra.mxu0 0
        %613 = vmatpush.bf16.msra.mxu0 %v561
        %614 = vmatpush.bf16.msra.mxu0 %v557
        %615 = vmatpush.bf16.msra.mxu0 %v553
        %616 = vmatpush.bf16.msra.mxu0 %v549
        %617 = vmatmul.bf16.gmra.mxu0 %v581
        %v618 = vpop.f32.mrf.mxu0
        %v619 = vadd.f32 %v493, %v618
        %v620 = vpop.f32.mrf.mxu0
        %621 = vdwg.mxu0
        %622 = vmatpush.bf16.msra.mxu0 0
        %623 = vmatpush.bf16.msra.mxu0 0
        %624 = vmatpush.bf16.msra.mxu0 0
        %625 = vmatpush.bf16.msra.mxu0 0
        %626 = vmatpush.bf16.msra.mxu0 %v562
        %627 = vmatpush.bf16.msra.mxu0 %v558
        %628 = vmatpush.bf16.msra.mxu0 %v554
        %629 = vmatpush.bf16.msra.mxu0 %v550
        %630 = vmatmul.bf16.gmra.mxu0 %v581
        %v631 = vpop.f32.mrf.mxu0
        %v632 = vadd.f32 %v494, %v631
        %v633 = vpop.f32.mrf.mxu0
        %634 = vdwg.mxu0
        %v635 = vmax.f32 %v593, 0.0
        %v636 = vmax.f32 %v606, 0.0
        %v637 = vmax.f32 %v619, 0.0
        %v638 = vmax.f32 %v632, 0.0
        %v639 = vpack.c.bf16 %v635, %v635
        %v640 = vpack.c.bf16 %v636, %v636
        %v641 = vpack.c.bf16 %v637, %v637
        %v642 = vpack.c.bf16 %v638, %v638
        %v643 = vld [vmem:[#allocation9] sm:$0xff]
        %v644 = vld [vmem:[#allocation9 + $0x8] sm:$0xff]
        %v645 = vld [vmem:[#allocation9 + $0x10] sm:$0xff]
        %v646 = vld [vmem:[#allocation9 + $0x18] sm:$0xff]
        %v647 = vld [vmem:[#allocation9 + $0x20] sm:$0xff]
        %v648 = vld [vmem:[#allocation9 + $0x28] sm:$0xff]
        %v649 = vld [vmem:[#allocation9 + $0x30] sm:$0xff]
        %v650 = vld [vmem:[#allocation9 + $0x38] sm:$0xff]
        %v651 = vld [vmem:[#allocation9 + $0x40] sm:$0xff]
        %v652 = vld [vmem:[#allocation9 + $0x48] sm:$0xff]
        %v653 = vld [vmem:[#allocation9 + $0x50] sm:$0xff]
        %v654 = vld [vmem:[#allocation9 + $0x58] sm:$0xff]
        %v655 = vld [vmem:[#allocation9 + $0x60] sm:$0xff]
        %v656 = vld [vmem:[#allocation9 + $0x68] sm:$0xff]
        %v657 = vld [vmem:[#allocation9 + $0x70] sm:$0xff]
        %v658 = vld [vmem:[#allocation9 + $0x78] sm:$0xff]
        %v659 = vld [vmem:[#allocation9 + $0x80] sm:$0xff]
        %v660 = vld [vmem:[#allocation9 + $0x88] sm:$0xff]
        %v661 = vld [vmem:[#allocation9 + $0x90] sm:$0xff]
        %v662 = vld [vmem:[#allocation9 + $0x98] sm:$0xff]
        %v663 = vld [vmem:[#allocation9 + $0xa0] sm:$0xff]
        %v664 = vld [vmem:[#allocation9 + $0xa8] sm:$0xff]
        %v665 = vld [vmem:[#allocation9 + $0xb0] sm:$0xff]
        %v666 = vld [vmem:[#allocation9 + $0xb8] sm:$0xff]
        %v667 = vld [vmem:[#allocation9 + $0xc0] sm:$0xff]
        %v668 = vld [vmem:[#allocation9 + $0xc8] sm:$0xff]
        %v669 = vld [vmem:[#allocation9 + $0xd0] sm:$0xff]
        %v670 = vld [vmem:[#allocation9 + $0xd8] sm:$0xff]
        %v671 = vld [vmem:[#allocation9 + $0xe0] sm:$0xff]
        %v672 = vld [vmem:[#allocation9 + $0xe8] sm:$0xff]
        %v673 = vld [vmem:[#allocation9 + $0xf0] sm:$0xff]
        %v674 = vld [vmem:[#allocation9 + $0xf8] sm:$0xff]
        %v675 = vld [vmem:[#allocation9 + $0x100] sm:$0xff]
        %v676 = vld [vmem:[#allocation9 + $0x108] sm:$0xff]
        %v677 = vld [vmem:[#allocation9 + $0x110] sm:$0xff]
        %v678 = vld [vmem:[#allocation9 + $0x118] sm:$0xff]
        %v679 = vld [vmem:[#allocation9 + $0x120] sm:$0xff]
        %v680 = vld [vmem:[#allocation9 + $0x128] sm:$0xff]
        %v681 = vld [vmem:[#allocation9 + $0x130] sm:$0xff]
        %v682 = vld [vmem:[#allocation9 + $0x138] sm:$0xff]
        %v683 = vld [vmem:[#allocation9 + $0x140] sm:$0xff]
        %v684 = vld [vmem:[#allocation9 + $0x148] sm:$0xff]
        %v685 = vld [vmem:[#allocation9 + $0x150] sm:$0xff]
        %v686 = vld [vmem:[#allocation9 + $0x158] sm:$0xff]
        %v687 = vld [vmem:[#allocation9 + $0x160] sm:$0xff]
        %v688 = vld [vmem:[#allocation9 + $0x168] sm:$0xff]
        %v689 = vld [vmem:[#allocation9 + $0x170] sm:$0xff]
        %v690 = vld [vmem:[#allocation9 + $0x178] sm:$0xff]
        %v691 = vld [vmem:[#allocation9 + $0x180] sm:$0xff]
        %v692 = vld [vmem:[#allocation9 + $0x188] sm:$0xff]
        %v693 = vld [vmem:[#allocation9 + $0x190] sm:$0xff]
        %v694 = vld [vmem:[#allocation9 + $0x198] sm:$0xff]
        %v695 = vld [vmem:[#allocation9 + $0x1a0] sm:$0xff]
        %v696 = vld [vmem:[#allocation9 + $0x1a8] sm:$0xff]
        %v697 = vld [vmem:[#allocation9 + $0x1b0] sm:$0xff]
        %v698 = vld [vmem:[#allocation9 + $0x1b8] sm:$0xff]
        %v699 = vld [vmem:[#allocation9 + $0x1c0] sm:$0xff]
        %v700 = vld [vmem:[#allocation9 + $0x1c8] sm:$0xff]
        %v701 = vld [vmem:[#allocation9 + $0x1d0] sm:$0xff]
        %v702 = vld [vmem:[#allocation9 + $0x1d8] sm:$0xff]
        %v703 = vld [vmem:[#allocation9 + $0x1e0] sm:$0xff]
        %v704 = vld [vmem:[#allocation9 + $0x1e8] sm:$0xff]
        %v705 = vld [vmem:[#allocation9 + $0x1f0] sm:$0xff]
        %v706 = vld [vmem:[#allocation9 + $0x1f8] sm:$0xff]
        %v707 = vld [vmem:[%s6] sm:$0x3]
        %v709 = vperm.slane %v707, 0
        %v710 = vperm.slane %v707, 1
        %v777 = vunpack.c.l.b16 %v643
        %v778 = vunpack.c.h.b16 %v643
        %v779 = vunpack.c.l.b16 %v644
        %v780 = vunpack.c.h.b16 %v644
        %v781 = vunpack.c.l.b16 %v645
        %v782 = vunpack.c.h.b16 %v645
        %v783 = vunpack.c.l.b16 %v646
        %v784 = vunpack.c.h.b16 %v646
        %v785 = vunpack.c.l.b16 %v647
        %v786 = vunpack.c.h.b16 %v647
        %v787 = vunpack.c.l.b16 %v648
        %v788 = vunpack.c.h.b16 %v648
        %v789 = vunpack.c.l.b16 %v649
        %v790 = vunpack.c.h.b16 %v649
        %v791 = vunpack.c.l.b16 %v650
        %v792 = vunpack.c.h.b16 %v650
        %v793 = vunpack.c.l.b16 %v651
        %v794 = vunpack.c.h.b16 %v651
        %v795 = vunpack.c.l.b16 %v652
        %v796 = vunpack.c.h.b16 %v652
        %v797 = vunpack.c.l.b16 %v653
        %v798 = vunpack.c.h.b16 %v653
        %v799 = vunpack.c.l.b16 %v654
        %v800 = vunpack.c.h.b16 %v654
        %v801 = vunpack.c.l.b16 %v655
        %v802 = vunpack.c.h.b16 %v655
        %v803 = vunpack.c.l.b16 %v656
        %v804 = vunpack.c.h.b16 %v656
        %v805 = vunpack.c.l.b16 %v657
        %v806 = vunpack.c.h.b16 %v657
        %v807 = vunpack.c.l.b16 %v658
        %v808 = vunpack.c.h.b16 %v658
        %v809 = vunpack.c.l.b16 %v659
        %v810 = vunpack.c.h.b16 %v659
        %v811 = vunpack.c.l.b16 %v660
        %v812 = vunpack.c.h.b16 %v660
        %v813 = vunpack.c.l.b16 %v661
        %v814 = vunpack.c.h.b16 %v661
        %v815 = vunpack.c.l.b16 %v662
        %v816 = vunpack.c.h.b16 %v662
        %v817 = vunpack.c.l.b16 %v663
        %v818 = vunpack.c.h.b16 %v663
        %v819 = vunpack.c.l.b16 %v664
        %v820 = vunpack.c.h.b16 %v664
        %v821 = vunpack.c.l.b16 %v665
        %v822 = vunpack.c.h.b16 %v665
        %v823 = vunpack.c.l.b16 %v666
        %v824 = vunpack.c.h.b16 %v666
        %v825 = vunpack.c.l.b16 %v667
        %v826 = vunpack.c.h.b16 %v667
        %v827 = vunpack.c.l.b16 %v668
        %v828 = vunpack.c.h.b16 %v668
        %v829 = vunpack.c.l.b16 %v669
        %v830 = vunpack.c.h.b16 %v669
        %v831 = vunpack.c.l.b16 %v670
        %v832 = vunpack.c.h.b16 %v670
        %v833 = vunpack.c.l.b16 %v671
        %v834 = vunpack.c.h.b16 %v671
        %v835 = vunpack.c.l.b16 %v672
        %v836 = vunpack.c.h.b16 %v672
        %v837 = vunpack.c.l.b16 %v673
        %v838 = vunpack.c.h.b16 %v673
        %v839 = vunpack.c.l.b16 %v674
        %v840 = vunpack.c.h.b16 %v674
        %v841 = vunpack.c.l.b16 %v675
        %v842 = vunpack.c.h.b16 %v675
        %v843 = vunpack.c.l.b16 %v676
        %v844 = vunpack.c.h.b16 %v676
        %v845 = vunpack.c.l.b16 %v677
        %v846 = vunpack.c.h.b16 %v677
        %v847 = vunpack.c.l.b16 %v678
        %v848 = vunpack.c.h.b16 %v678
        %v849 = vunpack.c.l.b16 %v679
        %v850 = vunpack.c.h.b16 %v679
        %v851 = vunpack.c.l.b16 %v680
        %v852 = vunpack.c.h.b16 %v680
        %v853 = vunpack.c.l.b16 %v681
        %v854 = vunpack.c.h.b16 %v681
        %v855 = vunpack.c.l.b16 %v682
        %v856 = vunpack.c.h.b16 %v682
        %v857 = vunpack.c.l.b16 %v683
        %v858 = vunpack.c.h.b16 %v683
        %v859 = vunpack.c.l.b16 %v684
        %v860 = vunpack.c.h.b16 %v684
        %v861 = vunpack.c.l.b16 %v685
        %v862 = vunpack.c.h.b16 %v685
        %v863 = vunpack.c.l.b16 %v686
        %v864 = vunpack.c.h.b16 %v686
        %v865 = vunpack.c.l.b16 %v687
        %v866 = vunpack.c.h.b16 %v687
        %v867 = vunpack.c.l.b16 %v688
        %v868 = vunpack.c.h.b16 %v688
        %v869 = vunpack.c.l.b16 %v689
        %v870 = vunpack.c.h.b16 %v689
        %v871 = vunpack.c.l.b16 %v690
        %v872 = vunpack.c.h.b16 %v690
        %v873 = vunpack.c.l.b16 %v691
        %v874 = vunpack.c.h.b16 %v691
        %v875 = vunpack.c.l.b16 %v692
        %v876 = vunpack.c.h.b16 %v692
        %v877 = vunpack.c.l.b16 %v693
        %v878 = vunpack.c.h.b16 %v693
        %v879 = vunpack.c.l.b16 %v694
        %v880 = vunpack.c.h.b16 %v694
        %v881 = vunpack.c.l.b16 %v695
        %v882 = vunpack.c.h.b16 %v695
        %v883 = vunpack.c.l.b16 %v696
        %v884 = vunpack.c.h.b16 %v696
        %v885 = vunpack.c.l.b16 %v697
        %v886 = vunpack.c.h.b16 %v697
        %v887 = vunpack.c.l.b16 %v698
        %v888 = vunpack.c.h.b16 %v698
        %v889 = vunpack.c.l.b16 %v699
        %v890 = vunpack.c.h.b16 %v699
        %v891 = vunpack.c.l.b16 %v700
        %v892 = vunpack.c.h.b16 %v700
        %v893 = vunpack.c.l.b16 %v701
        %v894 = vunpack.c.h.b16 %v701
        %v895 = vunpack.c.l.b16 %v702
        %v896 = vunpack.c.h.b16 %v702
        %v897 = vunpack.c.l.b16 %v703
        %v898 = vunpack.c.h.b16 %v703
        %v899 = vunpack.c.l.b16 %v704
        %v900 = vunpack.c.h.b16 %v704
        %v901 = vunpack.c.l.b16 %v705
        %v902 = vunpack.c.h.b16 %v705
        %v903 = vunpack.c.l.b16 %v706
        %v904 = vunpack.c.h.b16 %v706
        %v905 = vpack.c.b16 %v779, %v777
        %v906 = vpack.c.b16 %v780, %v778
        %v907 = vpack.c.b16 %v783, %v781
        %v908 = vpack.c.b16 %v784, %v782
        %v909 = vpack.c.b16 %v787, %v785
        %v910 = vpack.c.b16 %v788, %v786
        %v911 = vpack.c.b16 %v791, %v789
        %v912 = vpack.c.b16 %v792, %v790
        %v913 = vpack.c.b16 %v795, %v793
        %v914 = vpack.c.b16 %v796, %v794
        %v915 = vpack.c.b16 %v799, %v797
        %v916 = vpack.c.b16 %v800, %v798
        %v917 = vpack.c.b16 %v803, %v801
        %v918 = vpack.c.b16 %v804, %v802
        %v919 = vpack.c.b16 %v807, %v805
        %v920 = vpack.c.b16 %v808, %v806
        %v921 = vpack.c.b16 %v811, %v809
        %v922 = vpack.c.b16 %v812, %v810
        %v923 = vpack.c.b16 %v815, %v813
        %v924 = vpack.c.b16 %v816, %v814
        %v925 = vpack.c.b16 %v819, %v817
        %v926 = vpack.c.b16 %v820, %v818
        %v927 = vpack.c.b16 %v823, %v821
        %v928 = vpack.c.b16 %v824, %v822
        %v929 = vpack.c.b16 %v827, %v825
        %v930 = vpack.c.b16 %v828, %v826
        %v931 = vpack.c.b16 %v831, %v829
        %v932 = vpack.c.b16 %v832, %v830
        %v933 = vpack.c.b16 %v835, %v833
        %v934 = vpack.c.b16 %v836, %v834
        %v935 = vpack.c.b16 %v839, %v837
        %v936 = vpack.c.b16 %v840, %v838
        %v937 = vpack.c.b16 %v843, %v841
        %v938 = vpack.c.b16 %v844, %v842
        %v939 = vpack.c.b16 %v847, %v845
        %v940 = vpack.c.b16 %v848, %v846
        %v941 = vpack.c.b16 %v851, %v849
        %v942 = vpack.c.b16 %v852, %v850
        %v943 = vpack.c.b16 %v855, %v853
        %v944 = vpack.c.b16 %v856, %v854
        %v945 = vpack.c.b16 %v859, %v857
        %v946 = vpack.c.b16 %v860, %v858
        %v947 = vpack.c.b16 %v863, %v861
        %v948 = vpack.c.b16 %v864, %v862
        %v949 = vpack.c.b16 %v867, %v865
        %v950 = vpack.c.b16 %v868, %v866
        %v951 = vpack.c.b16 %v871, %v869
        %v952 = vpack.c.b16 %v872, %v870
        %v953 = vpack.c.b16 %v875, %v873
        %v954 = vpack.c.b16 %v876, %v874
        %v955 = vpack.c.b16 %v879, %v877
        %v956 = vpack.c.b16 %v880, %v878
        %v957 = vpack.c.b16 %v883, %v881
        %v958 = vpack.c.b16 %v884, %v882
        %v959 = vpack.c.b16 %v887, %v885
        %v960 = vpack.c.b16 %v888, %v886
        %v961 = vpack.c.b16 %v891, %v889
        %v962 = vpack.c.b16 %v892, %v890
        %v963 = vpack.c.b16 %v895, %v893
        %v964 = vpack.c.b16 %v896, %v894
        %v965 = vpack.c.b16 %v899, %v897
        %v966 = vpack.c.b16 %v900, %v898
        %v967 = vpack.c.b16 %v903, %v901
        %v968 = vpack.c.b16 %v904, %v902
        %1033 = vmatpush.bf16.msra.mxu0 %v919
        %1034 = vmatpush.bf16.msra.mxu0 %v917
        %1035 = vmatpush.bf16.msra.mxu0 %v915
        %1036 = vmatpush.bf16.msra.mxu0 %v913
        %1037 = vmatpush.bf16.msra.mxu0 %v911
        %1038 = vmatpush.bf16.msra.mxu0 %v909
        %1039 = vmatpush.bf16.msra.mxu0 %v907
        %1040 = vmatpush.bf16.msra.mxu0 %v905
        %1041 = vmatmul.bf16.gmra.mxu0 %v639
        %v1042 = vpop.f32.mrf.mxu0
        %v1043 = vadd.f32 %v709, %v1042
        %v1044 = vpop.f32.mrf.mxu0
        %1045 = vdwg.mxu0
        %1046 = vmatpush.bf16.msra.mxu0 %v935
        %1047 = vmatpush.bf16.msra.mxu0 %v933
        %1048 = vmatpush.bf16.msra.mxu0 %v931
        %1049 = vmatpush.bf16.msra.mxu0 %v929
        %1050 = vmatpush.bf16.msra.mxu0 %v927
        %1051 = vmatpush.bf16.msra.mxu0 %v925
        %1052 = vmatpush.bf16.msra.mxu0 %v923
        %1053 = vmatpush.bf16.msra.mxu0 %v921
        %1054 = vmatmul.bf16.gmra.mxu0 %v640
        %v1055 = vpop.f32.mrf.mxu0
        %v1056 = vadd.f32 %v1043, %v1055
        %v1057 = vpop.f32.mrf.mxu0
        %1058 = vdwg.mxu0
        %1059 = vmatpush.bf16.msra.mxu0 %v951
        %1060 = vmatpush.bf16.msra.mxu0 %v949
        %1061 = vmatpush.bf16.msra.mxu0 %v947
        %1062 = vmatpush.bf16.msra.mxu0 %v945
        %1063 = vmatpush.bf16.msra.mxu0 %v943
        %1064 = vmatpush.bf16.msra.mxu0 %v941
        %1065 = vmatpush.bf16.msra.mxu0 %v939
        %1066 = vmatpush.bf16.msra.mxu0 %v937
        %1067 = vmatmul.bf16.gmra.mxu0 %v641
        %v1068 = vpop.f32.mrf.mxu0
        %v1069 = vadd.f32 %v1056, %v1068
        %v1070 = vpop.f32.mrf.mxu0
        %1071 = vdwg.mxu0
        %1072 = vmatpush.bf16.msra.mxu0 %v967
        %1073 = vmatpush.bf16.msra.mxu0 %v965
        %1074 = vmatpush.bf16.msra.mxu0 %v963
        %1075 = vmatpush.bf16.msra.mxu0 %v961
        %1076 = vmatpush.bf16.msra.mxu0 %v959
        %1077 = vmatpush.bf16.msra.mxu0 %v957
        %1078 = vmatpush.bf16.msra.mxu0 %v955
        %1079 = vmatpush.bf16.msra.mxu0 %v953
        %1080 = vmatmul.bf16.gmra.mxu0 %v642
        %v1081 = vpop.f32.mrf.mxu0
        %v1082 = vadd.f32 %v1069, %v1081
        %v1083 = vpop.f32.mrf.mxu0
        %1084 = vdwg.mxu0
        %1085 = vmatpush.bf16.msra.mxu0 %v920
        %1086 = vmatpush.bf16.msra.mxu0 %v918
        %1087 = vmatpush.bf16.msra.mxu0 %v916
        %1088 = vmatpush.bf16.msra.mxu0 %v914
        %1089 = vmatpush.bf16.msra.mxu0 %v912
        %1090 = vmatpush.bf16.msra.mxu0 %v910
        %1091 = vmatpush.bf16.msra.mxu0 %v908
        %1092 = vmatpush.bf16.msra.mxu0 %v906
        %1093 = vmatmul.bf16.gmra.mxu0 %v639
        %v1094 = vpop.f32.mrf.mxu0
        %v1095 = vadd.f32 %v710, %v1094
        %v1096 = vpop.f32.mrf.mxu0
        %1097 = vdwg.mxu0
        %1098 = vmatpush.bf16.msra.mxu0 %v936
        %1099 = vmatpush.bf16.msra.mxu0 %v934
        %1100 = vmatpush.bf16.msra.mxu0 %v932
        %1101 = vmatpush.bf16.msra.mxu0 %v930
        %1102 = vmatpush.bf16.msra.mxu0 %v928
        %1103 = vmatpush.bf16.msra.mxu0 %v926
        %1104 = vmatpush.bf16.msra.mxu0 %v924
        %1105 = vmatpush.bf16.msra.mxu0 %v922
        %1106 = vmatmul.bf16.gmra.mxu0 %v640
        %v1107 = vpop.f32.mrf.mxu0
        %v1108 = vadd.f32 %v1095, %v1107
        %v1109 = vpop.f32.mrf.mxu0
        %1110 = vdwg.mxu0
        %1111 = vmatpush.bf16.msra.mxu0 %v952
        %1112 = vmatpush.bf16.msra.mxu0 %v950
        %1113 = vmatpush.bf16.msra.mxu0 %v948
        %1114 = vmatpush.bf16.msra.mxu0 %v946
        %1115 = vmatpush.bf16.msra.mxu0 %v944
        %1116 = vmatpush.bf16.msra.mxu0 %v942
        %1117 = vmatpush.bf16.msra.mxu0 %v940
        %1118 = vmatpush.bf16.msra.mxu0 %v938
        %1119 = vmatmul.bf16.gmra.mxu0 %v641
        %v1120 = vpop.f32.mrf.mxu0
        %v1121 = vadd.f32 %v1108, %v1120
        %v1122 = vpop.f32.mrf.mxu0
        %1123 = vdwg.mxu0
        %1124 = vmatpush.bf16.msra.mxu0 %v968
        %1125 = vmatpush.bf16.msra.mxu0 %v966
        %1126 = vmatpush.bf16.msra.mxu0 %v964
        %1127 = vmatpush.bf16.msra.mxu0 %v962
        %1128 = vmatpush.bf16.msra.mxu0 %v960
        %1129 = vmatpush.bf16.msra.mxu0 %v958
        %1130 = vmatpush.bf16.msra.mxu0 %v956
        %1131 = vmatpush.bf16.msra.mxu0 %v954
        %1132 = vmatmul.bf16.gmra.mxu0 %v642
        %v1133 = vpop.f32.mrf.mxu0
        %v1134 = vadd.f32 %v1121, %v1133
        %v1135 = vpop.f32.mrf.mxu0
        %1136 = vdwg.mxu0
        %v1137 = vmax.f32 %v1082, 0.0
        %v1138 = vmax.f32 %v1134, 0.0
        %v1139 = vpack.c.bf16 %v1137, %v1137
        %v1140 = vpack.c.bf16 %v1138, %v1138
        %v1141 = vld [vmem:[#allocation10] sm:$0xf]
        %v1142 = vld [vmem:[#allocation10 + $0x4] sm:$0xf]
        %v1143 = vld [vmem:[#allocation10 + $0x8] sm:$0xf]
        %v1144 = vld [vmem:[#allocation10 + $0xc] sm:$0xf]
        %v1145 = vld [vmem:[#allocation10 + $0x10] sm:$0xf]
        %v1146 = vld [vmem:[#allocation10 + $0x14] sm:$0xf]
        %v1147 = vld [vmem:[#allocation10 + $0x18] sm:$0xf]
        %v1148 = vld [vmem:[#allocation10 + $0x1c] sm:$0xf]
        %v1149 = vld [vmem:[#allocation10 + $0x20] sm:$0xf]
        %v1150 = vld [vmem:[#allocation10 + $0x24] sm:$0xf]
        %v1151 = vld [vmem:[#allocation10 + $0x28] sm:$0xf]
        %v1152 = vld [vmem:[#allocation10 + $0x2c] sm:$0xf]
        %v1153 = vld [vmem:[#allocation10 + $0x30] sm:$0xf]
        %v1154 = vld [vmem:[#allocation10 + $0x34] sm:$0xf]
        %v1155 = vld [vmem:[#allocation10 + $0x38] sm:$0xf]
        %v1156 = vld [vmem:[#allocation10 + $0x3c] sm:$0xf]
        %v1157 = vld [vmem:[#allocation10 + $0x40] sm:$0xf]
        %v1158 = vld [vmem:[#allocation10 + $0x44] sm:$0xf]
        %v1159 = vld [vmem:[#allocation10 + $0x48] sm:$0xf]
        %v1160 = vld [vmem:[#allocation10 + $0x4c] sm:$0xf]
        %v1161 = vld [vmem:[#allocation10 + $0x50] sm:$0xf]
        %v1162 = vld [vmem:[#allocation10 + $0x54] sm:$0xf]
        %v1163 = vld [vmem:[#allocation10 + $0x58] sm:$0xf]
        %v1164 = vld [vmem:[#allocation10 + $0x5c] sm:$0xf]
        %v1165 = vld [vmem:[#allocation10 + $0x60] sm:$0xf]
        %v1166 = vld [vmem:[#allocation10 + $0x64] sm:$0xf]
        %v1167 = vld [vmem:[#allocation10 + $0x68] sm:$0xf]
        %v1168 = vld [vmem:[#allocation10 + $0x6c] sm:$0xf]
        %v1169 = vld [vmem:[#allocation10 + $0x70] sm:$0xf]
        %v1170 = vld [vmem:[#allocation10 + $0x74] sm:$0xf]
        %v1171 = vld [vmem:[#allocation10 + $0x78] sm:$0xf]
        %v1172 = vld [vmem:[#allocation10 + $0x7c] sm:$0xf]
        %v1173 = vld [vmem:[%s8] sm:$0x1]
        %v1175 = vperm.slane %v1173, 0
        %v1209 = vunpack.c.l.b16 %v1141
        %v1210 = vunpack.c.l.b16 %v1142
        %v1211 = vunpack.c.l.b16 %v1143
        %v1212 = vunpack.c.l.b16 %v1144
        %v1213 = vunpack.c.l.b16 %v1145
        %v1214 = vunpack.c.l.b16 %v1146
        %v1215 = vunpack.c.l.b16 %v1147
        %v1216 = vunpack.c.l.b16 %v1148
        %v1217 = vunpack.c.l.b16 %v1149
        %v1218 = vunpack.c.l.b16 %v1150
        %v1219 = vunpack.c.l.b16 %v1151
        %v1220 = vunpack.c.l.b16 %v1152
        %v1221 = vunpack.c.l.b16 %v1153
        %v1222 = vunpack.c.l.b16 %v1154
        %v1223 = vunpack.c.l.b16 %v1155
        %v1224 = vunpack.c.l.b16 %v1156
        %v1225 = vunpack.c.l.b16 %v1157
        %v1226 = vunpack.c.l.b16 %v1158
        %v1227 = vunpack.c.l.b16 %v1159
        %v1228 = vunpack.c.l.b16 %v1160
        %v1229 = vunpack.c.l.b16 %v1161
        %v1230 = vunpack.c.l.b16 %v1162
        %v1231 = vunpack.c.l.b16 %v1163
        %v1232 = vunpack.c.l.b16 %v1164
        %v1233 = vunpack.c.l.b16 %v1165
        %v1234 = vunpack.c.l.b16 %v1166
        %v1235 = vunpack.c.l.b16 %v1167
        %v1236 = vunpack.c.l.b16 %v1168
        %v1237 = vunpack.c.l.b16 %v1169
        %v1238 = vunpack.c.l.b16 %v1170
        %v1239 = vunpack.c.l.b16 %v1171
        %v1240 = vunpack.c.l.b16 %v1172
        %v1241 = vpack.c.b16 %v1210, %v1209
        %v1242 = vpack.c.b16 %v1212, %v1211
        %v1243 = vpack.c.b16 %v1214, %v1213
        %v1244 = vpack.c.b16 %v1216, %v1215
        %v1245 = vpack.c.b16 %v1218, %v1217
        %v1246 = vpack.c.b16 %v1220, %v1219
        %v1247 = vpack.c.b16 %v1222, %v1221
        %v1248 = vpack.c.b16 %v1224, %v1223
        %v1249 = vpack.c.b16 %v1226, %v1225
        %v1250 = vpack.c.b16 %v1228, %v1227
        %v1251 = vpack.c.b16 %v1230, %v1229
        %v1252 = vpack.c.b16 %v1232, %v1231
        %v1253 = vpack.c.b16 %v1234, %v1233
        %v1254 = vpack.c.b16 %v1236, %v1235
        %v1255 = vpack.c.b16 %v1238, %v1237
        %v1256 = vpack.c.b16 %v1240, %v1239
        %1273 = vmatpush.bf16.msra.mxu0 %v1248
        %1274 = vmatpush.bf16.msra.mxu0 %v1247
        %1275 = vmatpush.bf16.msra.mxu0 %v1246
        %1276 = vmatpush.bf16.msra.mxu0 %v1245
        %1277 = vmatpush.bf16.msra.mxu0 %v1244
        %1278 = vmatpush.bf16.msra.mxu0 %v1243
        %1279 = vmatpush.bf16.msra.mxu0 %v1242
        %1280 = vmatpush.bf16.msra.mxu0 %v1241
        %1281 = vmatmul.bf16.gmra.mxu0 %v1139
        %v1282 = vpop.f32.mrf.mxu0
        %v1283 = vadd.f32 %v1175, %v1282
        %v1284 = vpop.f32.mrf.mxu0
        %1285 = vdwg.mxu0
        %1286 = vmatpush.bf16.msra.mxu0 %v1256
        %1287 = vmatpush.bf16.msra.mxu0 %v1255
        %1288 = vmatpush.bf16.msra.mxu0 %v1254
        %1289 = vmatpush.bf16.msra.mxu0 %v1253
        %1290 = vmatpush.bf16.msra.mxu0 %v1252
        %1291 = vmatpush.bf16.msra.mxu0 %v1251
        %1292 = vmatpush.bf16.msra.mxu0 %v1250
        %1293 = vmatpush.bf16.msra.mxu0 %v1249
        %1294 = vmatmul.bf16.gmra.mxu0 %v1140
        %v1295 = vpop.f32.mrf.mxu0
        %v1296 = vadd.f32 %v1283, %v1295
        %v1297 = vpop.f32.mrf.mxu0
        %1298 = vdwg.mxu0
        %vm1299 = vcmask 15360
        %1300 = vst.msk [vmem:[%s430] sm:$0xff] %vm1299, %v1296
        %p1301 = scmp.lt.s32.totalorder %s26, 1
        %s1302 = scalar_select %p1301, %s26, 1
        %s1303 = smul.addr %s1302, 8
        %s1304 = scalar_lea.vmem %s9, %s1303
        // Predicated region
        $region81: #{mlp_forward.1} parent=55 // pred_check
          %p1305 = pneg %p238
        $region82: #{mlp_forward.1} parent=55 // pred_check_branch
          %1307 = sbr.rel (%p1305) target = $region84
        $region83: #{mlp_forward.1} parent=55 // pred_region
          _
        $region84: #{mlp_forward.1} parent=55 // pred_fallthru
          _
      $region56: #{mlp_forward.1} parent=5 // pred_fallthru
        _
      %p1308 = scmp.le.s32.totalorder 2, %s21
      // Predicated region
      $region85: #{mlp_forward.1} parent=5 // pred_check
        %p1309 = pneg %p1308
      $region86: #{mlp_forward.1} parent=5 // pred_check_branch
        %1311 = sbr.rel (%p1309) target = $region88
      $region87: #{mlp_forward.1} parent=5 // pred_region
        %s1312 = ssub.s32 %s21, 2
        // Predicated region
        $region89: #{mlp_forward.1} parent=87 // pred_check
          %p1313 = pneg %p244
        $region90: #{mlp_forward.1} parent=87 // pred_check_branch
          %1315 = sbr.rel (%p1313) target = $region92
        $region91: #{mlp_forward.1} parent=87 // pred_region
          %p1316 = scmp.lt.s32.totalorder %s27, 1
          %s1317 = scalar_select %p1316, %s27, 1
          %s1318 = smul.addr %s1317, 8
          %s1319 = scalar_lea.vmem %s9, %s1318
        $region92: #{mlp_forward.1} parent=87 // pred_fallthru
          _
      $region88: #{mlp_forward.1} parent=5 // pred_fallthru
        _
    $region6: #{mlp_forward.1} parent=1 // loop_footer
      %s25 = sadd.s32 1, %s21
    $region7: #{mlp_forward.1} parent=1 // loop_footer_branch
      %20 = sbr.rel target = $region3
    $region8: #{mlp_forward.1} parent=1 // loop_exit
      _
    %1320 = vsyncpa [#allocation3], 1
    %s1321 = scalar_lea.sflag [#allocation3], 1
    %1322 = vsyncpa %s1321, 1
    %1323 = vsyncpa [#allocation5], 1
    %1324 = vsyncpa [#allocation8], 1
    %1325 = vsyncpa [#allocation11], 1

</llo_original>
